<compile_context>
chip_gen: v7x
topology: tpu7x:2x2x1
jax: 0.10.0
libtpu: 0.0.40
codegen_flags: <defaults>
</compile_context>

<pallas_src>
import jax
import jax.numpy as jnp
from jax.experimental import pallas as pl
from jax.experimental.pallas import tpu as pltpu

LANES = 128
SUBLANES = 8


def mlp_kernel(x_ref, p_ref, o_ref):
    """x_ref: (2, TR, 128) VMEM, feature-major, batch on (sublane, lane) axes.
    p_ref: (17,) SMEM flat params: w1[0:8] (row-major [in,out]), b1[8:12],
           w2[12:16], b2[16].
    o_ref: (TR, 128) VMEM dense output block."""
    # Read all scalars once (loop below is fully unrolled at trace time).
    w1 = [p_ref[k] for k in range(8)]          # w1[i*4+j] = W1[i, j]
    b1 = [p_ref[8 + k] for k in range(4)]
    w2 = [p_ref[12 + k] for k in range(4)]
    b2 = p_ref[16]

    x0 = x_ref[0]                              # (TR, 128) feature 0
    x1 = x_ref[1]                              # (TR, 128) feature 1

    # Accumulator starts at the fc2 bias (saves the trailing broadcast add).
    acc = jnp.full(x0.shape, b2, dtype=jnp.float32)
    # Fully unrolled over the 4 hidden units: pure VPU broadcast-FMAs + ReLU.
    for j in range(4):
        h_j = jnp.maximum(x0 * w1[j] + x1 * w1[4 + j] + b1[j], 0.0)
        acc = acc + h_j * w2[j]
    o_ref[...] = acc


def _round_up(n, m):
    return pl.cdiv(n, m) * m


def simple_nn_forward(x, w1, b1, w2, b2, *, max_batch_tile=512 * 1024):
    """Forward pass of SimpleNN.

    x: (B, 2) f32; w1: (2, 4); b1: (4,); w2: (4, 1); b2: (1,). Returns (B, 1).
    """
    B = x.shape[0]
    # Pad batch only to one dense (8, 128) slab = 1024 samples.
    Bp = int(_round_up(max(B, 1), SUBLANES * LANES))
    R = Bp // LANES                                     # rows, multiple of 8

    # Rows per grid step: multiple of 8, capped by max_batch_tile samples.
    max_rows = max(SUBLANES, (max_batch_tile // LANES) // SUBLANES * SUBLANES)
    t_rows = int(min(max_rows, R))
    grid = (int(pl.cdiv(R, t_rows)),)   # uneven last block OK: OOB writes are
                                        # dropped and padded lanes are sliced off.

    # Feature-major dense pack: (B, 2) -> (2, R, 128), zero-padded batch.
    xt = (
        jnp.zeros((2, Bp), jnp.float32)
        .at[:, :B].set(x.T.astype(jnp.float32))
        .reshape(2, R, LANES)
    )

    # All 17 parameters flattened into one SMEM-resident 1D array.
    params = jnp.concatenate(
        [
            w1.reshape(-1).astype(jnp.float32),   # (8,) row-major [in, out]
            b1.reshape(-1).astype(jnp.float32),   # (4,)
            w2.reshape(-1).astype(jnp.float32),   # (4,)
            b2.reshape(-1).astype(jnp.float32),   # (1,)
        ]
    )

    yt = pl.pallas_call(
        mlp_kernel,
        out_shape=jax.ShapeDtypeStruct((R, LANES), jnp.float32),
        grid=grid,
        in_specs=[
            pl.BlockSpec((2, t_rows, LANES), lambda i: (0, i, 0)),     # x slab
            pl.BlockSpec(memory_space=pltpu.MemorySpace.SMEM),         # params
        ],
        out_specs=pl.BlockSpec((t_rows, LANES), lambda i: (i, 0)),
        compiler_params=pltpu.CompilerParams(
            dimension_semantics=("parallel",),          # megacore on v7x
            vmem_limit_bytes=48 * 1024 * 1024,
        ),
        cost_estimate=pl.CostEstimate(
            flops=28 * Bp, transcendentals=0, bytes_accessed=12 * Bp
        ),
    )(xt, params)

    return yt.reshape(Bp)[:B].reshape(B, 1)


def init_params(key):
    """Deterministic init mirroring nn.Linear's U(-1/sqrt(fan_in), 1/sqrt(fan_in)).
    Weights stored transposed to (in, out) so the math is x @ W + b."""
    k1, k2, k3, k4 = jax.random.split(key, 4)
    bound1 = 1.0 / jnp.sqrt(2.0)   # fc1: in_features = 2
    bound2 = 1.0 / jnp.sqrt(4.0)   # fc2: in_features = 4
    w1 = jax.random.uniform(k1, (2, 4), jnp.float32, -bound1, bound1)
    b1 = jax.random.uniform(k2, (4,), jnp.float32, -bound1, bound1)
    w2 = jax.random.uniform(k3, (4, 1), jnp.float32, -bound2, bound2)
    b2 = jax.random.uniform(k4, (1,), jnp.float32, -bound2, bound2)
    return w1, b1, w2, b2


def _ref_forward(x, w1, b1, w2, b2):
    return jnp.maximum(x @ w1 + b1, 0.0) @ w2 + b2


if __name__ == "__main__":
    key = jax.random.PRNGKey(0)
    kx, kx2, kp = jax.random.split(key, 3)
    w1, b1, w2, b2 = init_params(kp)

    # Case 1: the module's literal input, x = torch.ones(2, 2).
    x = jnp.ones((2, 2), dtype=jnp.float32)
    out = simple_nn_forward(x, w1, b1, w2, b2)
    jax.block_until_ready(out)
    ref = _ref_forward(x, w1, b1, w2, b2)
    assert out.shape == (2, 1)
    assert jnp.allclose(out, ref, atol=1e-5), (out, ref)

    # Case 2: batched input, single dense (8, 128) grid step.
    x2 = jax.random.normal(kx, (384, 2), dtype=jnp.float32)
    out2 = simple_nn_forward(x2, w1, b1, w2, b2)
    jax.block_until_ready(out2)
    ref2 = _ref_forward(x2, w1, b1, w2, b2)
    assert out2.shape == (384, 1)
    assert jnp.allclose(out2, ref2, atol=1e-5)

    # Case 3: multiple grid steps (tile capped at 1024 samples -> 2 steps).
    x3 = jax.random.normal(kx2, (2048, 2), dtype=jnp.float32)
    out3 = simple_nn_forward(x3, w1, b1, w2, b2, max_batch_tile=1024)
    jax.block_until_ready(out3)
    ref3 = _ref_forward(x3, w1, b1, w2, b2)
    assert out3.shape == (2048, 1)
    assert jnp.allclose(out3, ref3, atol=1e-5)

    # TODO(synk): training loop / optimizer / autograd from the tutorial script
    # is out of scope; only the SimpleNN forward pass is implemented as a kernel.
    print("KERNEL_OK")
</pallas_src>

<mosaic_0001>
module attributes {stable_mosaic.version = 11 : i64} {
  func.func @mlp_kernel(%arg0: i32, %arg1: memref<2x8x128xf32, #tpu.memory_space<vmem>>, %arg2: memref<17xf32, #tpu.memory_space<smem>>, %arg3: memref<8x128xf32, #tpu.memory_space<vmem>>) attributes {dimension_semantics = [#tpu.dimension_semantics<parallel>], iteration_bounds = array<i64: 1>, scalar_prefetch = 0 : i64, scratch_operands = 0 : i64, tpu.core_type = #tpu.core_type<tc>, window_params = [{transform_indices = @transform_0, window_bounds = array<i64: 2, 8, 128>}, {transform_indices = @transform_1, window_bounds = array<i64: 17>}, {transform_indices = @transform_2, window_bounds = array<i64: 8, 128>}]} {
    %c0 = arith.constant 0 : index
    %0 = memref.load %arg2[%c0] : memref<17xf32, #tpu.memory_space<smem>>
    %c1 = arith.constant 1 : index
    %1 = memref.load %arg2[%c1] : memref<17xf32, #tpu.memory_space<smem>>
    %c2 = arith.constant 2 : index
    %2 = memref.load %arg2[%c2] : memref<17xf32, #tpu.memory_space<smem>>
    %c3 = arith.constant 3 : index
    %3 = memref.load %arg2[%c3] : memref<17xf32, #tpu.memory_space<smem>>
    %c4 = arith.constant 4 : index
    %4 = memref.load %arg2[%c4] : memref<17xf32, #tpu.memory_space<smem>>
    %c5 = arith.constant 5 : index
    %5 = memref.load %arg2[%c5] : memref<17xf32, #tpu.memory_space<smem>>
    %c6 = arith.constant 6 : index
    %6 = memref.load %arg2[%c6] : memref<17xf32, #tpu.memory_space<smem>>
    %c7 = arith.constant 7 : index
    %7 = memref.load %arg2[%c7] : memref<17xf32, #tpu.memory_space<smem>>
    %c8 = arith.constant 8 : index
    %8 = memref.load %arg2[%c8] : memref<17xf32, #tpu.memory_space<smem>>
    %c9 = arith.constant 9 : index
    %9 = memref.load %arg2[%c9] : memref<17xf32, #tpu.memory_space<smem>>
    %c10 = arith.constant 10 : index
    %10 = memref.load %arg2[%c10] : memref<17xf32, #tpu.memory_space<smem>>
    %c11 = arith.constant 11 : index
    %11 = memref.load %arg2[%c11] : memref<17xf32, #tpu.memory_space<smem>>
    %c12 = arith.constant 12 : index
    %12 = memref.load %arg2[%c12] : memref<17xf32, #tpu.memory_space<smem>>
    %c13 = arith.constant 13 : index
    %13 = memref.load %arg2[%c13] : memref<17xf32, #tpu.memory_space<smem>>
    %c14 = arith.constant 14 : index
    %14 = memref.load %arg2[%c14] : memref<17xf32, #tpu.memory_space<smem>>
    %c15 = arith.constant 15 : index
    %15 = memref.load %arg2[%c15] : memref<17xf32, #tpu.memory_space<smem>>
    %c16 = arith.constant 16 : index
    %16 = memref.load %arg2[%c16] : memref<17xf32, #tpu.memory_space<smem>>
    %c0_0 = arith.constant 0 : index
    %c0_1 = arith.constant 0 : index
    %c0_2 = arith.constant 0 : index
    %17 = vector.load %arg1[%c0_0, %c0_1, %c0_2] : memref<2x8x128xf32, #tpu.memory_space<vmem>>, vector<1x8x128xf32>
    %18 = vector.shape_cast %17 : vector<1x8x128xf32> to vector<8x128xf32>
    %c1_3 = arith.constant 1 : index
    %c0_4 = arith.constant 0 : index
    %c0_5 = arith.constant 0 : index
    %19 = vector.load %arg1[%c1_3, %c0_4, %c0_5] : memref<2x8x128xf32, #tpu.memory_space<vmem>>, vector<1x8x128xf32>
    %20 = vector.shape_cast %19 : vector<1x8x128xf32> to vector<8x128xf32>
    %21 = vector.broadcast %16 : f32 to vector<8x128xf32>
    %22 = vector.broadcast %0 : f32 to vector<8x128xf32>
    %23 = arith.mulf %18, %22 : vector<8x128xf32>
    %24 = vector.broadcast %4 : f32 to vector<8x128xf32>
    %25 = arith.mulf %20, %24 : vector<8x128xf32>
    %26 = arith.addf %23, %25 : vector<8x128xf32>
    %27 = vector.broadcast %8 : f32 to vector<8x128xf32>
    %28 = arith.addf %26, %27 : vector<8x128xf32>
    %cst = arith.constant 0.000000e+00 : f32
    %29 = vector.broadcast %cst : f32 to vector<8x128xf32>
    %30 = arith.maximumf %28, %29 : vector<8x128xf32>
    %31 = vector.broadcast %12 : f32 to vector<8x128xf32>
    %32 = arith.mulf %30, %31 : vector<8x128xf32>
    %33 = arith.addf %21, %32 : vector<8x128xf32>
    %34 = vector.broadcast %1 : f32 to vector<8x128xf32>
    %35 = arith.mulf %18, %34 : vector<8x128xf32>
    %36 = vector.broadcast %5 : f32 to vector<8x128xf32>
    %37 = arith.mulf %20, %36 : vector<8x128xf32>
    %38 = arith.addf %35, %37 : vector<8x128xf32>
    %39 = vector.broadcast %9 : f32 to vector<8x128xf32>
    %40 = arith.addf %38, %39 : vector<8x128xf32>
    %cst_6 = arith.constant 0.000000e+00 : f32
    %41 = vector.broadcast %cst_6 : f32 to vector<8x128xf32>
    %42 = arith.maximumf %40, %41 : vector<8x128xf32>
    %43 = vector.broadcast %13 : f32 to vector<8x128xf32>
    %44 = arith.mulf %42, %43 : vector<8x128xf32>
    %45 = arith.addf %33, %44 : vector<8x128xf32>
    %46 = vector.broadcast %2 : f32 to vector<8x128xf32>
    %47 = arith.mulf %18, %46 : vector<8x128xf32>
    %48 = vector.broadcast %6 : f32 to vector<8x128xf32>
    %49 = arith.mulf %20, %48 : vector<8x128xf32>
    %50 = arith.addf %47, %49 : vector<8x128xf32>
    %51 = vector.broadcast %10 : f32 to vector<8x128xf32>
    %52 = arith.addf %50, %51 : vector<8x128xf32>
    %cst_7 = arith.constant 0.000000e+00 : f32
    %53 = vector.broadcast %cst_7 : f32 to vector<8x128xf32>
    %54 = arith.maximumf %52, %53 : vector<8x128xf32>
    %55 = vector.broadcast %14 : f32 to vector<8x128xf32>
    %56 = arith.mulf %54, %55 : vector<8x128xf32>
    %57 = arith.addf %45, %56 : vector<8x128xf32>
    %58 = vector.broadcast %3 : f32 to vector<8x128xf32>
    %59 = arith.mulf %18, %58 : vector<8x128xf32>
    %60 = vector.broadcast %7 : f32 to vector<8x128xf32>
    %61 = arith.mulf %20, %60 : vector<8x128xf32>
    %62 = arith.addf %59, %61 : vector<8x128xf32>
    %63 = vector.broadcast %11 : f32 to vector<8x128xf32>
    %64 = arith.addf %62, %63 : vector<8x128xf32>
    %cst_8 = arith.constant 0.000000e+00 : f32
    %65 = vector.broadcast %cst_8 : f32 to vector<8x128xf32>
    %66 = arith.maximumf %64, %65 : vector<8x128xf32>
    %67 = vector.broadcast %15 : f32 to vector<8x128xf32>
    %68 = arith.mulf %66, %67 : vector<8x128xf32>
    %69 = arith.addf %57, %68 : vector<8x128xf32>
    %c0_9 = arith.constant 0 : index
    %c0_10 = arith.constant 0 : index
    %70 = vector.load %arg3[%c0_9, %c0_10] : memref<8x128xf32, #tpu.memory_space<vmem>>, vector<8x128xf32>
    tpu.vector_store %arg3[%c0_9, %c0_10], %69 {strides = array<i32>} : memref<8x128xf32, #tpu.memory_space<vmem>>, vector<8x128xf32>,
    return
  }
  func.func @transform_0(%arg0: i32) -> (i32, i32, i32) {
    %c0_i32 = arith.constant 0 : i32
    %c0_i32_0 = arith.constant 0 : i32
    %c0_i32_1 = arith.constant 0 : i32
    return %c0_i32, %arg0, %c0_i32_0 : i32, i32, i32
  }
  func.func @transform_1(%arg0: i32) -> i32 {
    %c0_i32 = arith.constant 0 : i32
    %c0_i32_0 = arith.constant 0 : i32
    return %c0_i32 : i32
  }
  func.func @transform_2(%arg0: i32) -> (i32, i32) {
    %c0_i32 = arith.constant 0 : i32
    %c0_i32_0 = arith.constant 0 : i32
    return %arg0, %c0_i32 : i32, i32
  }
}

</mosaic_0001>

<llo_original>
// kernel: tpu_custom_call.1
$region0: #{tpu_custom_call.1}
  #allocation0 [shape = 'u32[]', space=smem, size = 0x4, offset = 0x4, fixed_abs, tag = 'smem constant byte address 0x4 - core index']
  #allocation1 [shape = 'u32[144,128]{1,0:T(1,128)}', space=vmem, size = 0x12000, scoped, tag = 'internal scratch']
  %s0 = inlined_call_operand.hbm [shape: f32[2,8,128], index: 0, kind: input, shape index: {}]
  %s1 = inlined_call_operand.vmem [shape: f32[17], index: 1, kind: input, shape index: {}]
  %s2 = inlined_call_operand.hbm [shape: f32[8,128], index: 2, kind: output, shape index: {}]
  %s3 = sld [smem:[#allocation0]]
  $region26: #{tpu_custom_call.1} parent=0
    _
  %s5 = ssub.s32 1, %s3
  %s6 = scalar_select 0, %s5, %s3
  $region1: #{tpu_custom_call.1} parent=0
    #allocation2 [shape = 'u8[8192]{0}', space=vmem, size = 0x2000, scoped, tag = 'input window, operand 0, single buffered']
    #allocation3 [shape = 's32[1]{0}', space=sflag, size = 0x4, scoped, tag = 'scoped memory for tpu_custom_call.1']
    #allocation4 [shape = 's32[1]{0}', space=sflag, size = 0x4, scoped, tag = 'scoped memory for tpu_custom_call.1']
    #allocation5 [shape = 's32[1]{0}', space=sflag, size = 0x4, scoped, tag = 'scoped memory for tpu_custom_call.1']
    #allocation6 [shape = 'u8[512]{0}', space=smem, size = 0x200, scoped, tag = 'input window, operand 1, single buffered']
    #allocation7 [shape = 'u8[4096]{0}', space=vmem, size = 0x1000, scoped, tag = 'output window, operand 0, single buffered']
    %7 = vsyncpa [#allocation3], 0
    %8 = vsyncpa [#allocation5], 0
    %9 = vsyncpa [#allocation4], 0
    // Predicated region
    $region2: #{tpu_custom_call.1} parent=1 // pred_check
      _
    $region3: #{tpu_custom_call.1} parent=1 // pred_check_branch
      %11 = sbr.rel (0) target = $region5
    $region4: #{tpu_custom_call.1} parent=1 // pred_region
      %s13 = ssub.s32 256, 256
      %14 = vsyncadd [#allocation3], %s13
      %s15 = sshll.u32 [#allocation2], 4
      %s16 = int_to_ptr.vmem [resolvable:$true] %s15
      %21 = dma.hbm_to_vmem [thread:$0]  %s0, 256, %s16, [#allocation3], 128, 128, 8
    $region5: #{tpu_custom_call.1} parent=1 // pred_fallthru
      _
    // Predicated region
    $region6: #{tpu_custom_call.1} parent=1 // pred_check
      _
    $region7: #{tpu_custom_call.1} parent=1 // pred_check_branch
      %23 = sbr.rel (0) target = $region9
    $region8: #{tpu_custom_call.1} parent=1 // pred_region
      %s25 = ssub.s32 16, 16
      %26 = vsyncadd [#allocation5], %s25
      %s28 = sshll.u32 %s1, 4
      %s29 = int_to_ptr.vmem [resolvable:$true] %s28
      %31 = dma.vmem_to_smem %s29, 16, [#allocation6], [#allocation5]
    $region9: #{tpu_custom_call.1} parent=1 // pred_fallthru
      _
    // Predicated region
    $region10: #{tpu_custom_call.1} parent=1 // pred_check
      _
    $region11: #{tpu_custom_call.1} parent=1 // pred_check_branch
      %33 = sbr.rel (0) target = $region13
    $region12: #{tpu_custom_call.1} parent=1 // pred_region
      %34 = dma.done [#allocation3], 256
    $region13: #{tpu_custom_call.1} parent=1 // pred_fallthru
      _
    // Predicated region
    $region14: #{tpu_custom_call.1} parent=1 // pred_check
      _
    $region15: #{tpu_custom_call.1} parent=1 // pred_check_branch
      %36 = sbr.rel (0) target = $region17
    $region16: #{tpu_custom_call.1} parent=1 // pred_region
      %37 = dma.done [#allocation5], 16
    $region17: #{tpu_custom_call.1} parent=1 // pred_fallthru
      _
    %38 = sfence
    %s39 = sld [smem:[#allocation6]]
    %s40 = sld [smem:[#allocation6 + $0x1]]
    %s41 = sld [smem:[#allocation6 + $0x2]]
    %s42 = sld [smem:[#allocation6 + $0x3]]
    %s43 = sld [smem:[#allocation6 + $0x4]]
    %s44 = sld [smem:[#allocation6 + $0x5]]
    %s45 = sld [smem:[#allocation6 + $0x6]]
    %s46 = sld [smem:[#allocation6 + $0x7]]
    %s47 = sld [smem:[#allocation6 + $0x8]]
    %s48 = sld [smem:[#allocation6 + $0x9]]
    %s49 = sld [smem:[#allocation6 + $0xa]]
    %s50 = sld [smem:[#allocation6 + $0xb]]
    %s51 = sld [smem:[#allocation6 + $0xc]]
    %s52 = sld [smem:[#allocation6 + $0xd]]
    %s53 = sld [smem:[#allocation6 + $0xe]]
    %s54 = sld [smem:[#allocation6 + $0xf]]
    %s55 = sld [smem:[#allocation6 + $0x10]]
    %v56 = vld [vmem:[#allocation2] sm:$0xff]
    %s57 = scalar_lea.vmem [#allocation2], 8
    %v58 = vld [vmem:[%s57] sm:$0xff]
    %v59 = vstv %s55
    %v60 = vstv %s39
    %v61 = vmul.f32 %v56, %v60
    %v62 = vstv %s43
    %v63 = vmul.f32 %v58, %v62
    %v64 = vadd.f32 %v61, %v63
    %v65 = vstv %s47
    %v66 = vadd.f32 %v64, %v65
    %v67 = vmax.f32 %v66, 0.0
    %v68 = vstv %s51
    %v69 = vmul.f32 %v67, %v68
    %v70 = vadd.f32 %v59, %v69
    %v71 = vstv %s40
    %v72 = vmul.f32 %v56, %v71
    %v73 = vstv %s44
    %v74 = vmul.f32 %v58, %v73
    %v75 = vadd.f32 %v72, %v74
    %v76 = vstv %s48
    %v77 = vadd.f32 %v75, %v76
    %v78 = vmax.f32 %v77, 0.0
    %v79 = vstv %s52
    %v80 = vmul.f32 %v78, %v79
    %v81 = vadd.f32 %v70, %v80
    %v82 = vstv %s41
    %v83 = vmul.f32 %v56, %v82
    %v84 = vstv %s45
    %v85 = vmul.f32 %v58, %v84
    %v86 = vadd.f32 %v83, %v85
    %v87 = vstv %s49
    %v88 = vadd.f32 %v86, %v87
    %v89 = vmax.f32 %v88, 0.0
    %v90 = vstv %s53
    %v91 = vmul.f32 %v89, %v90
    %v92 = vadd.f32 %v81, %v91
    %v93 = vstv %s42
    %v94 = vmul.f32 %v56, %v93
    %v95 = vstv %s46
    %v96 = vmul.f32 %v58, %v95
    %v97 = vadd.f32 %v94, %v96
    %v98 = vstv %s50
    %v99 = vadd.f32 %v97, %v98
    %v100 = vmax.f32 %v99, 0.0
    %v101 = vstv %s54
    %v102 = vmul.f32 %v100, %v101
    %v103 = vadd.f32 %v92, %v102
    %104 = vst [vmem:[#allocation7] sm:$0xff] %v103
    // Predicated region
    $region18: #{tpu_custom_call.1} parent=1 // pred_check
      _
    $region19: #{tpu_custom_call.1} parent=1 // pred_check_branch
      %106 = sbr.rel (0) target = $region21
    $region20: #{tpu_custom_call.1} parent=1 // pred_region
      %s108 = ssub.s32 128, 128
      %109 = vsyncadd [#allocation4], %s108
      %s111 = sshll.u32 [#allocation7], 4
      %s112 = int_to_ptr.vmem [resolvable:$true] %s111
      %114 = dma.vmem_to_hbm [thread:$0]  %s112, 128, %s2, [#allocation4]
    $region21: #{tpu_custom_call.1} parent=1 // pred_fallthru
      _
    // Predicated region
    $region22: #{tpu_custom_call.1} parent=1 // pred_check
      _
    $region23: #{tpu_custom_call.1} parent=1 // pred_check_branch
      %116 = sbr.rel (0) target = $region25
    $region24: #{tpu_custom_call.1} parent=1 // pred_region
      %117 = dma.done [#allocation4], 128
    $region25: #{tpu_custom_call.1} parent=1 // pred_fallthru
      _
    %118 = vsyncpa [#allocation3], 1
    %119 = vsyncpa [#allocation4], 1
    %120 = vsyncpa [#allocation5], 1

</llo_original>
